<compile_context>
chip_gen: v6e
topology: v6e:2x2x1
jax: 0.10.0
libtpu: 0.0.40
codegen_flags: <defaults>
</compile_context>

<pallas_src>
import jax
import jax.numpy as jnp
from jax.experimental import pallas as pl
from jax.experimental.pallas import tpu as pltpu

MAX_LENGTH = 10   # attention span L
HIDDEN = 32       # hidden_size H
OUTPUT = 64       # output_size (vocab) O

ATTN_OFF = 3 * HIDDEN                  # 96: attn-logit lanes [96, 96+L)
SLAB_ROWS = 5 * HIDDEN + 8             # fused weight+bias slab rows
assert ATTN_OFF + MAX_LENGTH <= 128
assert OUTPUT + HIDDEN + MAX_LENGTH <= 128


def attn_decoder_kernel(
    tok_ref,        # SMEM (T,) int32 token ids (scalar prefetch)
    emb_ref,        # (O, 1, H) VMEM-resident embedding table
    h0_ref,         # (1, H)    initial hidden state
    enc_ref,        # (L, H)    encoder outputs
    w_ref,          # (5H+8, 256) fused weight+bias slab
    out_ref,        # (1, 1, 128) packed per-step output [log_probs | h_new | attn_w | pad]
    h_state,        # VMEM scratch (1, H): hidden state carried across timesteps
):
    f32 = jnp.float32
    H, L, O, A = HIDDEN, MAX_LENGTH, OUTPUT, ATTN_OFF
    BR = 5 * H                      # first bias row of the slab

    t = pl.program_id(0)

    @pl.when(t == 0)
    def _():
        h_state[...] = h0_ref[...]

    # Embedding lookup from the VMEM-resident table (token clamped in-kernel).
    tok = jnp.clip(tok_ref[t], 0, O - 1)
    emb = emb_ref[tok]                               # (1, H)
    # nn.Dropout(p=0.1): identity in eval mode.
    # TODO(synk): training-mode dropout randomness is not reproduced here.
    h = h_state[...]                                 # (1, H)

    # One fused MXU issue for both the emb-driven and hidden-driven projections.
    eh = jnp.concatenate([emb, h], axis=1)           # (1, 2H)
    res = jnp.dot(eh, w_ref[0:2 * H, :], preferred_element_type=f32) \
        + w_ref[BR:BR + 1, :]                        # (1, 256)
    e_out = res[:, 0:128]                            # wce | ... | wae(+ba) ... ; bc folded
    h_out = res[:, 128:256]                          # whr|whz|whn(+bh*) | ... | wah

    # attn_weights = softmax(attn(cat(embedded, hidden)))
    attn_logits = e_out[:, A:A + L] + h_out[:, A:A + L]          # (1, L)
    m = jnp.max(attn_logits, axis=1, keepdims=True)
    p = jnp.exp(attn_logits - m)
    attn_w = p * pl.reciprocal(jnp.sum(p, axis=1, keepdims=True))  # (1, L)

    # attn_applied = bmm(attn_w, encoder_outputs)   (batch = 1)
    applied = jnp.dot(attn_w, enc_ref[...], preferred_element_type=f32)  # (1, H)

    # attn_combine(cat(embedded, attn_applied)) -> relu
    ca_out = jnp.dot(applied, w_ref[2 * H:3 * H, 0:128],
                     preferred_element_type=f32)                 # (1, 128)
    x = jnp.maximum(e_out[:, 0:H] + ca_out[:, 0:H], 0.0)         # (1, H)

    # Single-step GRU (PyTorch gate order r, z, n), gates fused along lanes.
    x_out = jnp.dot(x, w_ref[3 * H:4 * H, 0:128],
                    preferred_element_type=f32) + w_ref[BR + 1:BR + 2, 0:128]
    rz = jax.nn.sigmoid(x_out[:, 0:2 * H] + h_out[:, 0:2 * H])
    r = rz[:, 0:H]
    z = rz[:, H:2 * H]
    n = jnp.tanh(x_out[:, 2 * H:3 * H] + r * h_out[:, 2 * H:3 * H])
    h_new = (1.0 - z) * n + z * h                                # (1, H)
    h_state[...] = h_new                                         # carry to next step

    # output = log_softmax(out(gru_output))
    logits = (jnp.dot(h_new, w_ref[4 * H:5 * H, 0:128],
                      preferred_element_type=f32)
              + w_ref[BR + 2:BR + 3, 0:128])[:, 0:O]
    mo = jnp.max(logits, axis=1, keepdims=True)
    shifted = logits - mo
    lse = jnp.log(jnp.sum(jnp.exp(shifted), axis=1, keepdims=True))
    out_log = shifted - lse                                      # (1, O)

    # Pack the three per-step outputs into one lane-dense store.
    pad = jnp.zeros((1, 128 - O - H - L), f32)
    out_ref[0] = jnp.concatenate([out_log, h_new, attn_w, pad], axis=1)


def init_params(key, hidden=HIDDEN, output=OUTPUT, max_length=MAX_LENGTH):
    """Per-layer parameters (used by the pure-JAX reference and by pack_params)."""
    H, O, L = hidden, output, max_length
    ks = jax.random.split(key, 24)

    def u(k, shape, fan_in):
        bound = 1.0 / jnp.sqrt(jnp.float32(fan_in))
        return jax.random.uniform(k, shape, jnp.float32, -bound, bound)

    return dict(
        emb=jax.random.normal(ks[0], (O, H), jnp.float32),
        # attn: Linear(2H -> L), transposed & split over the concat axis
        wae=u(ks[1], (H, L), 2 * H), wah=u(ks[2], (H, L), 2 * H), ba=u(ks[3], (1, L), 2 * H),
        # attn_combine: Linear(2H -> H), transposed & split
        wce=u(ks[4], (H, H), 2 * H), wca=u(ks[5], (H, H), 2 * H), bc=u(ks[6], (1, H), 2 * H),
        # GRU weights, transposed & split per gate (r, z, n)
        wir=u(ks[7], (H, H), H), wiz=u(ks[8], (H, H), H), win=u(ks[9], (H, H), H),
        bir=u(ks[10], (1, H), H), biz=u(ks[11], (1, H), H), bin=u(ks[12], (1, H), H),
        whr=u(ks[13], (H, H), H), whz=u(ks[14], (H, H), H), whn=u(ks[15], (H, H), H),
        bhr=u(ks[16], (1, H), H), bhz=u(ks[17], (1, H), H), bhn=u(ks[18], (1, H), H),
        # out: Linear(H -> O), transposed
        wo=u(ks[19], (H, O), H), bo=u(ks[20], (1, O), H),
    )


def pack_params(params):
    """Fuse ALL weights and biases into one (5H+8, 256) slab + the embedding table."""
    H, L, O, A = HIDDEN, MAX_LENGTH, OUTPUT, ATTN_OFF
    W = jnp.zeros((SLAB_ROWS, 256), jnp.float32)

    # W_eh (rows 0:2H): fused [emb | h] projection.
    W = W.at[0:H, 0:H].set(params['wce'])
    W = W.at[0:H, A:A + L].set(params['wae'])
    W = W.at[H:2 * H, 128:128 + H].set(params['whr'])
    W = W.at[H:2 * H, 128 + H:128 + 2 * H].set(params['whz'])
    W = W.at[H:2 * H, 128 + 2 * H:128 + 3 * H].set(params['whn'])
    W = W.at[H:2 * H, 128 + A:128 + A + L].set(params['wah'])
    # W_ca (rows 2H:3H): attn_applied branch of attn_combine.
    W = W.at[2 * H:3 * H, 0:H].set(params['wca'])
    # W_x (rows 3H:4H): GRU input gates.
    W = W.at[3 * H:4 * H, 0:H].set(params['wir'])
    W = W.at[3 * H:4 * H, H:2 * H].set(params['wiz'])
    W = W.at[3 * H:4 * H, 2 * H:3 * H].set(params['win'])
    # W_o (rows 4H:5H): output projection.
    W = W.at[4 * H:5 * H, 0:O].set(params['wo'])

    be = 5 * H
    # bias row for the fused [emb|h] projection (bc, ba, and GRU hidden biases folded).
    W = W.at[be, 0:H].set(params['bc'][0])
    W = W.at[be, A:A + L].set(params['ba'][0])
    W = W.at[be, 128:128 + H].set(params['bhr'][0])
    W = W.at[be, 128 + H:128 + 2 * H].set(params['bhz'][0])
    W = W.at[be, 128 + 2 * H:128 + 3 * H].set(params['bhn'][0])
    # GRU input-gate bias row.
    W = W.at[be + 1, 0:H].set(params['bir'][0])
    W = W.at[be + 1, H:2 * H].set(params['biz'][0])
    W = W.at[be + 1, 2 * H:3 * H].set(params['bin'][0])
    # output-projection bias row.
    W = W.at[be + 2, 0:O].set(params['bo'][0])

    emb_table = params['emb'].reshape(O, 1, H)   # leading axis indexed in-kernel
    return W, emb_table


def attn_decoder_decode(packed, tokens, hidden, encoder_outputs):
    """Run T decoder steps in ONE pallas_call (weights/emb/enc stay VMEM-resident).

    tokens: (T,) int32; hidden: (1,1,H) f32; encoder_outputs: (L,H) f32.
    Returns (log_probs (T,O), hiddens (T,H), attn_weights (T,L)).
    """
    H, L, O = HIDDEN, MAX_LENGTH, OUTPUT
    W, emb_table = packed

    tok = tokens.reshape(-1).astype(jnp.int32)
    T = tok.shape[0]
    h0 = hidden.reshape(1, H).astype(jnp.float32)
    enc = encoder_outputs.astype(jnp.float32)

    grid_spec = pltpu.PrefetchScalarGridSpec(
        num_scalar_prefetch=1,
        grid=(T,),
        in_specs=[
            pl.BlockSpec((O, 1, H), lambda t, tok_ref: (0, 0, 0)),         # emb table (resident)
            pl.BlockSpec((1, H), lambda t, tok_ref: (0, 0)),               # h0 (resident)
            pl.BlockSpec((L, H), lambda t, tok_ref: (0, 0)),               # encoder outputs
            pl.BlockSpec((SLAB_ROWS, 256), lambda t, tok_ref: (0, 0)),     # fused W+B slab
        ],
        out_specs=pl.BlockSpec((1, 1, 128), lambda t, tok_ref: (t, 0, 0)),
        scratch_shapes=[pltpu.VMEM((1, H), jnp.float32)],                  # carried hidden state
    )

    packed_out = pl.pallas_call(
        attn_decoder_kernel,
        out_shape=jax.ShapeDtypeStruct((T, 1, 128), jnp.float32),
        grid_spec=grid_spec,
        compiler_params=pltpu.CompilerParams(dimension_semantics=("arbitrary",)),
    )(tok, emb_table, h0, enc, W)

    flat = packed_out.reshape(T, 128)
    out_log = flat[:, 0:O]
    h_all = flat[:, O:O + H]
    attn_w = flat[:, O + H:O + H + L]
    return out_log, h_all, attn_w


def attn_decoder_forward(packed, token, hidden, encoder_outputs):
    """Single decode step (matches the PyTorch module forward): T=1 of the fused kernel."""
    out_log, h_all, attn_w = attn_decoder_decode(
        packed, token.reshape(1), hidden, encoder_outputs)
    return out_log, h_all.reshape(1, 1, HIDDEN), attn_w


def reference_forward(params, token, hidden, encoder_outputs):
    """Pure-JAX reference replicating the PyTorch forward (eval mode)."""
    H = HIDDEN
    emb = params['emb'][token.reshape(())].reshape(1, H)
    h = hidden.reshape(1, H)
    attn_logits = emb @ params['wae'] + h @ params['wah'] + params['ba']
    attn_w = jax.nn.softmax(attn_logits, axis=1)
    attn_applied = attn_w @ encoder_outputs
    x = jax.nn.relu(emb @ params['wce'] + attn_applied @ params['wca'] + params['bc'])
    r = jax.nn.sigmoid(x @ params['wir'] + params['bir'] + h @ params['whr'] + params['bhr'])
    z = jax.nn.sigmoid(x @ params['wiz'] + params['biz'] + h @ params['whz'] + params['bhz'])
    n = jnp.tanh(x @ params['win'] + params['bin'] + r * (h @ params['whn'] + params['bhn']))
    h_new = (1.0 - z) * n + z * h
    out = jax.nn.log_softmax(h_new @ params['wo'] + params['bo'], axis=1)
    return out, h_new.reshape(1, 1, H), attn_w


def reference_decode(params, tokens, hidden, encoder_outputs):
    outs, hs, attns = [], [], []
    h = hidden
    for t in range(int(tokens.shape[0])):
        out, h, attn = reference_forward(params, tokens[t].reshape(1, 1), h, encoder_outputs)
        outs.append(out)
        hs.append(h.reshape(1, HIDDEN))
        attns.append(attn)
    return (jnp.concatenate(outs, 0), jnp.concatenate(hs, 0), jnp.concatenate(attns, 0))


if __name__ == "__main__":
    key = jax.random.PRNGKey(0)
    pkey, ekey = jax.random.split(key)
    params = init_params(pkey)
    packed = pack_params(params)

    encoder_outputs = jax.random.normal(ekey, (MAX_LENGTH, HIDDEN), jnp.float32)
    hidden0 = jnp.zeros((1, 1, HIDDEN), dtype=jnp.float32)   # initHidden()

    # --- Single step (module forward contract) ---
    token = jnp.array([[3]], dtype=jnp.int32)
    out_log, h_new, attn_w = attn_decoder_forward(packed, token, hidden0, encoder_outputs)
    jax.block_until_ready((out_log, h_new, attn_w))

    ref_out, ref_h, ref_attn = reference_forward(params, token, hidden0, encoder_outputs)
    assert out_log.shape == (1, OUTPUT)
    assert h_new.shape == (1, 1, HIDDEN)
    assert attn_w.shape == (1, MAX_LENGTH)
    assert jnp.allclose(out_log, ref_out, atol=1e-4, rtol=1e-4)
    assert jnp.allclose(h_new, ref_h, atol=1e-4, rtol=1e-4)
    assert jnp.allclose(attn_w, ref_attn, atol=1e-4, rtol=1e-4)

    # --- Full decode loop in one pallas_call (teacher-forced tokens, T=8) ---
    tokens = jnp.array([3, 1, 7, 0, 5, 2, 63, 9], dtype=jnp.int32)
    out_seq, h_seq, attn_seq = attn_decoder_decode(packed, tokens, hidden0, encoder_outputs)
    jax.block_until_ready((out_seq, h_seq, attn_seq))

    ref_out_seq, ref_h_seq, ref_attn_seq = reference_decode(params, tokens, hidden0,
                                                            encoder_outputs)
    assert out_seq.shape == (tokens.shape[0], OUTPUT)
    assert h_seq.shape == (tokens.shape[0], HIDDEN)
    assert attn_seq.shape == (tokens.shape[0], MAX_LENGTH)
    assert jnp.allclose(out_seq, ref_out_seq, atol=5e-4, rtol=5e-4)
    assert jnp.allclose(h_seq, ref_h_seq, atol=5e-4, rtol=5e-4)
    assert jnp.allclose(attn_seq, ref_attn_seq, atol=5e-4, rtol=5e-4)

    print("KERNEL_OK")
</pallas_src>

<mosaic_0001>
module attributes {stable_mosaic.version = 11 : i64} {
  func.func @attn_decoder_kernel(%arg0: i32, %arg1: memref<1xi32, #tpu.memory_space<smem>>, %arg2: memref<64x1x32xf32, #tpu.memory_space<vmem>>, %arg3: memref<1x32xf32, #tpu.memory_space<vmem>>, %arg4: memref<10x32xf32, #tpu.memory_space<vmem>>, %arg5: memref<168x256xf32, #tpu.memory_space<vmem>>, %arg6: memref<1x1x128xf32, #tpu.memory_space<vmem>>, %arg7: memref<1x32xf32, #tpu.memory_space<vmem>>) attributes {dimension_semantics = [#tpu.dimension_semantics<arbitrary>], iteration_bounds = array<i64: 1>, scalar_prefetch = 1 : i64, scratch_operands = 1 : i64, tpu.core_type = #tpu.core_type<tc>, window_params = [{pipeline_mode = #tpu.pipeline_mode<synchronous>, transform_indices = @transform_0, window_bounds = array<i64: 64, 1, 32>}, {pipeline_mode = #tpu.pipeline_mode<synchronous>, transform_indices = @transform_1, window_bounds = array<i64: 1, 32>}, {pipeline_mode = #tpu.pipeline_mode<synchronous>, transform_indices = @transform_2, window_bounds = array<i64: 10, 32>}, {pipeline_mode = #tpu.pipeline_mode<synchronous>, transform_indices = @transform_3, window_bounds = array<i64: 168, 256>}, {transform_indices = @transform_4, window_bounds = array<i64: 1, 1, 128>}]} {
    %c0_i32 = arith.constant 0 : i32
    %0 = arith.cmpi eq, %arg0, %c0_i32 : i32
    %1 = arith.extui %0 : i1 to i32
    %c0_i32_0 = arith.constant 0 : i32
    %2 = arith.cmpi ne, %1, %c0_i32_0 : i32
    scf.if %2 {
      %c0_32 = arith.constant 0 : index
      %c0_33 = arith.constant 0 : index
      %85 = vector.load %arg3[%c0_32, %c0_33] : memref<1x32xf32, #tpu.memory_space<vmem>>, vector<1x32xf32>
      %c0_34 = arith.constant 0 : index
      %c0_35 = arith.constant 0 : index
      %86 = vector.load %arg7[%c0_34, %c0_35] : memref<1x32xf32, #tpu.memory_space<vmem>>, vector<1x32xf32>
      tpu.vector_store %arg7[%c0_34, %c0_35], %85 {strides = array<i32>} : memref<1x32xf32, #tpu.memory_space<vmem>>, vector<1x32xf32>,
    } else {
    }
    %3 = arith.index_cast %arg0 : i32 to index
    %4 = memref.load %arg1[%3] : memref<1xi32, #tpu.memory_space<smem>>
    %c0_i32_1 = arith.constant 0 : i32
    %c63_i32 = arith.constant 63 : i32
    %5 = arith.maxsi %c0_i32_1, %4 : i32
    %6 = arith.minsi %c63_i32, %5 : i32
    %7 = arith.index_cast %6 : i32 to index
    %c0 = arith.constant 0 : index
    %c0_2 = arith.constant 0 : index
    %8 = vector.load %arg2[%7, %c0, %c0_2] : memref<64x1x32xf32, #tpu.memory_space<vmem>>, vector<1x1x32xf32>
    %9 = vector.shape_cast %8 : vector<1x1x32xf32> to vector<1x32xf32>
    %c0_3 = arith.constant 0 : index
    %c0_4 = arith.constant 0 : index
    %10 = vector.load %arg7[%c0_3, %c0_4] : memref<1x32xf32, #tpu.memory_space<vmem>>, vector<1x32xf32>
    %11 = tpu.concatenate %9, %10 in 1 : vector<1x32xf32>, vector<1x32xf32> -> vector<1x64xf32>
    %c0_5 = arith.constant 0 : index
    %c0_6 = arith.constant 0 : index
    %12 = vector.load %arg5[%c0_5, %c0_6] : memref<168x256xf32, #tpu.memory_space<vmem>>, vector<64x256xf32>
    %cst = arith.constant dense<0.000000e+00> : vector<1x256xf32>
    %13 = tpu.matmul %11, %12, %cst {dimension_numbers = #tpu.dot_dimension_numbers<[1], [0], [0], [1], [0, 0, 1, 1], [], []>} : vector<1x64xf32>, vector<64x256xf32>, vector<1x256xf32> -> vector<1x256xf32>
    %c160 = arith.constant 160 : index
    %c0_7 = arith.constant 0 : index
    %14 = vector.load %arg5[%c160, %c0_7] : memref<168x256xf32, #tpu.memory_space<vmem>>, vector<1x256xf32>
    %15 = arith.addf %13, %14 : vector<1x256xf32>
    %16 = vector.extract_strided_slice %15 {offsets = [0, 0], sizes = [1, 128], strides = [1, 1]} : vector<1x256xf32> to vector<1x128xf32>
    %17 = vector.extract_strided_slice %15 {offsets = [0, 128], sizes = [1, 128], strides = [1, 1]} : vector<1x256xf32> to vector<1x128xf32>
    %18 = vector.extract_strided_slice %16 {offsets = [0, 96], sizes = [1, 10], strides = [1, 1]} : vector<1x128xf32> to vector<1x10xf32>
    %19 = vector.extract_strided_slice %17 {offsets = [0, 96], sizes = [1, 10], strides = [1, 1]} : vector<1x128xf32> to vector<1x10xf32>
    %20 = arith.addf %18, %19 : vector<1x10xf32>
    %cst_8 = arith.constant dense<0xFF800000> : vector<1xf32>
    %21 = vector.multi_reduction <maximumf>, %20, %cst_8 [1] : vector<1x10xf32> to vector<1xf32>
    %22 = vector.shape_cast %21 : vector<1xf32> to vector<1x1xf32>
    %23 = vector.broadcast %22 : vector<1x1xf32> to vector<1x10xf32>
    %24 = arith.subf %20, %23 : vector<1x10xf32>
    %25 = math.exp %24 : vector<1x10xf32>
    %cst_9 = arith.constant dense<0.000000e+00> : vector<1xf32>
    %26 = vector.multi_reduction <add>, %25, %cst_9 [1] : vector<1x10xf32> to vector<1xf32>
    %27 = vector.shape_cast %26 : vector<1xf32> to vector<1x1xf32>
    %28 = tpu.reciprocal %27 : vector<1x1xf32> -> vector<1x1xf32>
    %29 = vector.broadcast %28 : vector<1x1xf32> to vector<1x10xf32>
    %30 = arith.mulf %25, %29 : vector<1x10xf32>
    %c0_10 = arith.constant 0 : index
    %c0_11 = arith.constant 0 : index
    %31 = vector.load %arg4[%c0_10, %c0_11] : memref<10x32xf32, #tpu.memory_space<vmem>>, vector<10x32xf32>
    %cst_12 = arith.constant dense<0.000000e+00> : vector<1x32xf32>
    %32 = tpu.matmul %30, %31, %cst_12 {dimension_numbers = #tpu.dot_dimension_numbers<[1], [0], [0], [1], [0, 0, 1, 1], [], []>} : vector<1x10xf32>, vector<10x32xf32>, vector<1x32xf32> -> vector<1x32xf32>
    %c64 = arith.constant 64 : index
    %c0_13 = arith.constant 0 : index
    %33 = vector.load %arg5[%c64, %c0_13] : memref<168x256xf32, #tpu.memory_space<vmem>>, vector<32x128xf32>
    %cst_14 = arith.constant dense<0.000000e+00> : vector<1x128xf32>
    %34 = tpu.matmul %32, %33, %cst_14 {dimension_numbers = #tpu.dot_dimension_numbers<[1], [0], [0], [1], [0, 0, 1, 1], [], []>} : vector<1x32xf32>, vector<32x128xf32>, vector<1x128xf32> -> vector<1x128xf32>
    %35 = vector.extract_strided_slice %16 {offsets = [0, 0], sizes = [1, 32], strides = [1, 1]} : vector<1x128xf32> to vector<1x32xf32>
    %36 = vector.extract_strided_slice %34 {offsets = [0, 0], sizes = [1, 32], strides = [1, 1]} : vector<1x128xf32> to vector<1x32xf32>
    %37 = arith.addf %35, %36 : vector<1x32xf32>
    %cst_15 = arith.constant 0.000000e+00 : f32
    %38 = vector.broadcast %cst_15 : f32 to vector<1x32xf32>
    %39 = arith.maximumf %37, %38 : vector<1x32xf32>
    %c96 = arith.constant 96 : index
    %c0_16 = arith.constant 0 : index
    %40 = vector.load %arg5[%c96, %c0_16] : memref<168x256xf32, #tpu.memory_space<vmem>>, vector<32x128xf32>
    %cst_17 = arith.constant dense<0.000000e+00> : vector<1x128xf32>
    %41 = tpu.matmul %39, %40, %cst_17 {dimension_numbers = #tpu.dot_dimension_numbers<[1], [0], [0], [1], [0, 0, 1, 1], [], []>} : vector<1x32xf32>, vector<32x128xf32>, vector<1x128xf32> -> vector<1x128xf32>
    %c161 = arith.constant 161 : index
    %c0_18 = arith.constant 0 : index
    %42 = vector.load %arg5[%c161, %c0_18] : memref<168x256xf32, #tpu.memory_space<vmem>>, vector<1x128xf32>
    %43 = arith.addf %41, %42 : vector<1x128xf32>
    %44 = vector.extract_strided_slice %43 {offsets = [0, 0], sizes = [1, 64], strides = [1, 1]} : vector<1x128xf32> to vector<1x64xf32>
    %45 = vector.extract_strided_slice %17 {offsets = [0, 0], sizes = [1, 64], strides = [1, 1]} : vector<1x128xf32> to vector<1x64xf32>
    %46 = arith.addf %44, %45 : vector<1x64xf32>
    %47 = arith.negf %46 : vector<1x64xf32>
    %48 = math.exp %47 : vector<1x64xf32>
    %cst_19 = arith.constant 1.000000e+00 : f32
    %49 = vector.broadcast %cst_19 : f32 to vector<1x64xf32>
    %50 = arith.addf %49, %48 : vector<1x64xf32>
    %51 = arith.divf %49, %50 : vector<1x64xf32>
    %52 = vector.extract_strided_slice %51 {offsets = [0, 0], sizes = [1, 32], strides = [1, 1]} : vector<1x64xf32> to vector<1x32xf32>
    %53 = vector.extract_strided_slice %51 {offsets = [0, 32], sizes = [1, 32], strides = [1, 1]} : vector<1x64xf32> to vector<1x32xf32>
    %54 = vector.extract_strided_slice %43 {offsets = [0, 64], sizes = [1, 32], strides = [1, 1]} : vector<1x128xf32> to vector<1x32xf32>
    %55 = vector.extract_strided_slice %17 {offsets = [0, 64], sizes = [1, 32], strides = [1, 1]} : vector<1x128xf32> to vector<1x32xf32>
    %56 = arith.mulf %52, %55 : vector<1x32xf32>
    %57 = arith.addf %54, %56 : vector<1x32xf32>
    %58 = math.tanh %57 : vector<1x32xf32>
    %cst_20 = arith.constant 1.000000e+00 : f32
    %59 = vector.broadcast %cst_20 : f32 to vector<1x32xf32>
    %60 = arith.subf %59, %53 : vector<1x32xf32>
    %61 = arith.mulf %60, %58 : vector<1x32xf32>
    %62 = arith.mulf %53, %10 : vector<1x32xf32>
    %63 = arith.addf %61, %62 : vector<1x32xf32>
    %c0_21 = arith.constant 0 : index
    %c0_22 = arith.constant 0 : index
    %64 = vector.load %arg7[%c0_21, %c0_22] : memref<1x32xf32, #tpu.memory_space<vmem>>, vector<1x32xf32>
    tpu.vector_store %arg7[%c0_21, %c0_22], %63 {strides = array<i32>} : memref<1x32xf32, #tpu.memory_space<vmem>>, vector<1x32xf32>,
    %c128 = arith.constant 128 : index
    %c0_23 = arith.constant 0 : index
    %65 = vector.load %arg5[%c128, %c0_23] : memref<168x256xf32, #tpu.memory_space<vmem>>, vector<32x128xf32>
    %cst_24 = arith.constant dense<0.000000e+00> : vector<1x128xf32>
    %66 = tpu.matmul %63, %65, %cst_24 {dimension_numbers = #tpu.dot_dimension_numbers<[1], [0], [0], [1], [0, 0, 1, 1], [], []>} : vector<1x32xf32>, vector<32x128xf32>, vector<1x128xf32> -> vector<1x128xf32>
    %c162 = arith.constant 162 : index
    %c0_25 = arith.constant 0 : index
    %67 = vector.load %arg5[%c162, %c0_25] : memref<168x256xf32, #tpu.memory_space<vmem>>, vector<1x128xf32>
    %68 = arith.addf %66, %67 : vector<1x128xf32>
    %69 = vector.extract_strided_slice %68 {offsets = [0, 0], sizes = [1, 64], strides = [1, 1]} : vector<1x128xf32> to vector<1x64xf32>
    %cst_26 = arith.constant dense<0xFF800000> : vector<1xf32>
    %70 = vector.multi_reduction <maximumf>, %69, %cst_26 [1] : vector<1x64xf32> to vector<1xf32>
    %71 = vector.shape_cast %70 : vector<1xf32> to vector<1x1xf32>
    %72 = vector.broadcast %71 : vector<1x1xf32> to vector<1x64xf32>
    %73 = arith.subf %69, %72 : vector<1x64xf32>
    %74 = math.exp %73 : vector<1x64xf32>
    %cst_27 = arith.constant dense<0.000000e+00> : vector<1xf32>
    %75 = vector.multi_reduction <add>, %74, %cst_27 [1] : vector<1x64xf32> to vector<1xf32>
    %76 = vector.shape_cast %75 : vector<1xf32> to vector<1x1xf32>
    %77 = math.log %76 : vector<1x1xf32>
    %78 = vector.broadcast %77 : vector<1x1xf32> to vector<1x64xf32>
    %79 = arith.subf %73, %78 : vector<1x64xf32>
    %cst_28 = arith.constant 0.000000e+00 : f32
    %80 = vector.broadcast %cst_28 : f32 to vector<1x22xf32>
    %81 = tpu.concatenate %79, %63, %30, %80 in 1 : vector<1x64xf32>, vector<1x32xf32>, vector<1x10xf32>, vector<1x22xf32> -> vector<1x128xf32>
    %c0_29 = arith.constant 0 : index
    %c0_30 = arith.constant 0 : index
    %c0_31 = arith.constant 0 : index
    %82 = vector.load %arg6[%c0_29, %c0_30, %c0_31] : memref<1x1x128xf32, #tpu.memory_space<vmem>>, vector<1x1x128xf32>
    %83 = vector.shape_cast %82 : vector<1x1x128xf32> to vector<1x128xf32>
    %84 = vector.shape_cast %81 : vector<1x128xf32> to vector<1x1x128xf32>
    tpu.vector_store %arg6[%c0_29, %c0_30, %c0_31], %84 {strides = array<i32>} : memref<1x1x128xf32, #tpu.memory_space<vmem>>, vector<1x1x128xf32>,
    return
  }
  func.func @transform_0(%arg0: i32, %arg1: memref<1xi32, #tpu.memory_space<smem>>) -> (i32, i32, i32) {
    %c0_i32 = arith.constant 0 : i32
    %c0_i32_0 = arith.constant 0 : i32
    %c0_i32_1 = arith.constant 0 : i32
    %c0_i32_2 = arith.constant 0 : i32
    return %c0_i32, %c0_i32_0, %c0_i32_1 : i32, i32, i32
  }
  func.func @transform_1(%arg0: i32, %arg1: memref<1xi32, #tpu.memory_space<smem>>) -> (i32, i32) {
    %c0_i32 = arith.constant 0 : i32
    %c0_i32_0 = arith.constant 0 : i32
    %c0_i32_1 = arith.constant 0 : i32
    return %c0_i32, %c0_i32_0 : i32, i32
  }
  func.func @transform_2(%arg0: i32, %arg1: memref<1xi32, #tpu.memory_space<smem>>) -> (i32, i32) {
    %c0_i32 = arith.constant 0 : i32
    %c0_i32_0 = arith.constant 0 : i32
    %c0_i32_1 = arith.constant 0 : i32
    return %c0_i32, %c0_i32_0 : i32, i32
  }
  func.func @transform_3(%arg0: i32, %arg1: memref<1xi32, #tpu.memory_space<smem>>) -> (i32, i32) {
    %c0_i32 = arith.constant 0 : i32
    %c0_i32_0 = arith.constant 0 : i32
    %c0_i32_1 = arith.constant 0 : i32
    return %c0_i32, %c0_i32_0 : i32, i32
  }
  func.func @transform_4(%arg0: i32, %arg1: memref<1xi32, #tpu.memory_space<smem>>) -> (i32, i32, i32) {
    %c0_i32 = arith.constant 0 : i32
    %c0_i32_0 = arith.constant 0 : i32
    %c0_i32_1 = arith.constant 0 : i32
    return %arg0, %c0_i32, %c0_i32_0 : i32, i32, i32
  }
}

</mosaic_0001>

<llo_original>
// kernel: tpu_custom_call.1
$region0: #{tpu_custom_call.1}
  #allocation0 [shape = 'u32[]', space=smem, size = 0x4, offset = 0x4, fixed_abs, tag = 'smem constant byte address 0x4 - core index']
  #allocation1 [shape = 'u32[144,128]{1,0:T(1,128)}', space=vmem, size = 0x12000, scoped, tag = 'internal scratch']
  #allocation2 [shape = 'f32[1,32]{1,0:T(1,128)}', space=vmem, size = 0x200, scoped, tag = 'scratch operand']
  #allocation3 [shape = 's32[1]{0}', space=sflag, size = 0x4, scoped, tag = 'scoped memory for tpu_custom_call.1']
  #allocation4 [shape = 's32[1]{0:T(128)S(6)}', space=smem, size = 0x200, scoped, tag = 'prefetched SMEM operand 0']
  %s0 = inlined_call_operand.<no memory space> [shape: s32[1], index: 0, kind: input, shape index: {}]
  %s1 = inlined_call_operand.vmem [shape: f32[64,1,32], index: 1, kind: input, shape index: {}]
  %s2 = inlined_call_operand.vmem [shape: f32[1,32], index: 2, kind: input, shape index: {}]
  %s3 = inlined_call_operand.vmem [shape: f32[10,32], index: 3, kind: input, shape index: {}]
  %s4 = inlined_call_operand.hbm [shape: f32[168,256], index: 4, kind: input, shape index: {}]
  %s5 = inlined_call_operand.hbm [shape: f32[1,1,128], index: 5, kind: output, shape index: {}]
  %s6 = sld [smem:[#allocation0]]
  $region34: #{tpu_custom_call.1} parent=0
    _
  %s8 = ssub.s32 1, %s6
  %s9 = scalar_select 0, %s8, %s6
  %10 = sst [smem:[#allocation4]] %s0
  $region1: #{tpu_custom_call.1} parent=0
    #allocation5 [shape = 'u8[172032]{0}', space=vmem, size = 0x2a000, scoped, tag = 'input window, operand 4, single buffered']
    #allocation6 [shape = 's32[1]{0}', space=sflag, size = 0x4, scoped, tag = 'scoped memory for tpu_custom_call.1']
    #allocation7 [shape = 's32[1]{0}', space=sflag, size = 0x4, scoped, tag = 'scoped memory for tpu_custom_call.1']
    #allocation8 [shape = 'u8[512]{0}', space=vmem, size = 0x400, scoped, tag = 'output window, operand 0, single buffered']
    %11 = vsyncpa [#allocation6], 0
    %12 = vsyncpa [#allocation7], 0
    // Predicated region
    $region2: #{tpu_custom_call.1} parent=1 // pred_check
      _
    $region3: #{tpu_custom_call.1} parent=1 // pred_check_branch
      %14 = sbr.rel (0) target = $region5
    $region4: #{tpu_custom_call.1} parent=1 // pred_region
      _
    $region5: #{tpu_custom_call.1} parent=1 // pred_fallthru
      _
    // Predicated region
    $region6: #{tpu_custom_call.1} parent=1 // pred_check
      _
    $region7: #{tpu_custom_call.1} parent=1 // pred_check_branch
      %16 = sbr.rel (0) target = $region9
    $region8: #{tpu_custom_call.1} parent=1 // pred_region
      _
    $region9: #{tpu_custom_call.1} parent=1 // pred_fallthru
      _
    // Predicated region
    $region10: #{tpu_custom_call.1} parent=1 // pred_check
      _
    $region11: #{tpu_custom_call.1} parent=1 // pred_check_branch
      %18 = sbr.rel (0) target = $region13
    $region12: #{tpu_custom_call.1} parent=1 // pred_region
      _
    $region13: #{tpu_custom_call.1} parent=1 // pred_fallthru
      _
    // Predicated region
    $region14: #{tpu_custom_call.1} parent=1 // pred_check
      _
    $region15: #{tpu_custom_call.1} parent=1 // pred_check_branch
      %20 = sbr.rel (0) target = $region17
    $region16: #{tpu_custom_call.1} parent=1 // pred_region
      %s22 = ssub.s32 5376, 5376
      %23 = vsyncadd [#allocation6], %s22
      %s24 = sshll.u32 [#allocation5], 4
      %s25 = int_to_ptr.vmem [resolvable:$true] %s24
      %30 = dma.hbm_to_vmem [thread:$0]  %s4, 5376, %s25, [#allocation6], 256, 256, 16
    $region17: #{tpu_custom_call.1} parent=1 // pred_fallthru
      _
    // Predicated region
    $region18: #{tpu_custom_call.1} parent=1 // pred_check
      _
    $region19: #{tpu_custom_call.1} parent=1 // pred_check_branch
      %32 = sbr.rel (0) target = $region21
    $region20: #{tpu_custom_call.1} parent=1 // pred_region
      %33 = dma.done [#allocation6], 5376
    $region21: #{tpu_custom_call.1} parent=1 // pred_fallthru
      _
    %p34 = scmp.eq.s32.totalorder 0, 0
    // Predicated region
    $region22: #{tpu_custom_call.1} parent=1 // pred_check
      %p35 = pneg %p34
    $region23: #{tpu_custom_call.1} parent=1 // pred_check_branch
      %37 = sbr.rel (%p35) target = $region25
    $region24: #{tpu_custom_call.1} parent=1 // pred_region
      %v38 = vld [vmem:[%s2] sm:$0x1]
      %vm39 = vcmask 253952
      %40 = vst.msk [vmem:[#allocation2] sm:$0x1] %vm39, %v38
    $region25: #{tpu_custom_call.1} parent=1 // pred_fallthru
      _
    %s41 = sld [smem:[#allocation4]]
    %p42 = scmp.gt.s32.totalorder %s41, 0
    %s43 = scalar_select %p42, %s41, 0
    %p44 = scmp.lt.s32.totalorder %s43, 63
    %s45 = scalar_select %p44, %s43, 63
    %s46 = scalar_lea.vmem %s1, %s45
    %v47 = vld [vmem:[%s46] sm:$0x1]
    %v48 = vld [vmem:[#allocation2] sm:$0x1]
    %v50 = vlaneseq
    %v51 = vshrl.u32 %v50, 7
    %v52 = vsub.s32 0, %v51
    %v53 = vrot.slane %v48, %v52
    %54 = vrot.lane.b32.xlu0 %v53, 32
    %v55 = vpop.permute.xlu0 %54
    %vm57 = vcmask 261120
    %v58 = vsel %vm57, %v47, %v55
    %v59 = vld [vmem:[#allocation5] sm:$0xff]
    %v60 = vld [vmem:[#allocation5 + $0x8] sm:$0xff]
    %v61 = vld [vmem:[#allocation5 + $0x10] sm:$0xff]
    %v62 = vld [vmem:[#allocation5 + $0x18] sm:$0xff]
    %v63 = vld [vmem:[#allocation5 + $0x20] sm:$0xff]
    %v64 = vld [vmem:[#allocation5 + $0x28] sm:$0xff]
    %v65 = vld [vmem:[#allocation5 + $0x30] sm:$0xff]
    %v66 = vld [vmem:[#allocation5 + $0x38] sm:$0xff]
    %v67 = vld [vmem:[#allocation5 + $0x40] sm:$0xff]
    %v68 = vld [vmem:[#allocation5 + $0x48] sm:$0xff]
    %v69 = vld [vmem:[#allocation5 + $0x50] sm:$0xff]
    %v70 = vld [vmem:[#allocation5 + $0x58] sm:$0xff]
    %v71 = vld [vmem:[#allocation5 + $0x60] sm:$0xff]
    %v72 = vld [vmem:[#allocation5 + $0x68] sm:$0xff]
    %v73 = vld [vmem:[#allocation5 + $0x70] sm:$0xff]
    %v74 = vld [vmem:[#allocation5 + $0x78] sm:$0xff]
    %s75 = scalar_lea.vmem [#allocation5], 320
    %v76 = vld [vmem:[%s75] ss:$8 sm:$0x3]
    %v78 = vlaneseq
    %v79 = vshrl.u32 %v78, 7
    %v80 = vsub.s32 0, %v79
    %v81 = vrot.slane %v76, %v80
    %v82 = vlaneseq
    %v83 = vshrl.u32 %v82, 7
    %v84 = vsub.s32 1, %v83
    %v85 = vrot.slane %v76, %v84
    %vm88 = vcmask 523264
    %v90 = vsel %vm88, %v58, 0
    %92 = vmatprep.subr.mxu0 0.0
    %93 = vmatpush1.msra.mxu0 0.0
    %94 = vmatprep.subr.mxu0 0.0
    %95 = vmatpush1.msra.mxu0 0.0
    %96 = vmatprep.subr.mxu0 0.0
    %97 = vmatpush1.msra.mxu0 0.0
    %98 = vmatprep.subr.mxu0 0.0
    %99 = vmatpush1.msra.mxu0 0.0
    %100 = vmatprep.subr.mxu0 0.0
    %101 = vmatpush1.msra.mxu0 0.0
    %102 = vmatprep.subr.mxu0 0.0
    %103 = vmatpush1.msra.mxu0 0.0
    %104 = vmatprep.subr.mxu0 0.0
    %105 = vmatpush1.msra.mxu0 0.0
    %106 = vmatprep.subr.mxu0 0.0
    %107 = vmatpush1.msra.mxu0 0.0
    %108 = vmatprep.subr.mxu0 %v74
    %109 = vmatpush1.msra.mxu0 %v73
    %110 = vmatprep.subr.mxu0 %v72
    %111 = vmatpush1.msra.mxu0 %v71
    %112 = vmatprep.subr.mxu0 %v70
    %113 = vmatpush1.msra.mxu0 %v69
    %114 = vmatprep.subr.mxu0 %v68
    %115 = vmatpush1.msra.mxu0 %v67
    %116 = vmatprep.subr.mxu0 %v66
    %117 = vmatpush1.msra.mxu0 %v65
    %118 = vmatprep.subr.mxu0 %v64
    %119 = vmatpush1.msra.mxu0 %v63
    %120 = vmatprep.subr.mxu0 %v62
    %121 = vmatpush1.msra.mxu0 %v61
    %122 = vmatprep.subr.mxu0 %v60
    %123 = vmatpush1.msra.mxu0 %v59
    %124 = vmatprep.subr.mxu0 0.0
    %125 = vmatpush2.msra.mxu0 0.0
    %126 = vmatprep.subr.mxu0 0.0
    %127 = vmatpush2.msra.mxu0 0.0
    %128 = vmatprep.subr.mxu0 0.0
    %129 = vmatpush2.msra.mxu0 0.0
    %130 = vmatprep.subr.mxu0 0.0
    %131 = vmatpush2.msra.mxu0 0.0
    %132 = vmatprep.subr.mxu0 0.0
    %133 = vmatpush2.msra.mxu0 0.0
    %134 = vmatprep.subr.mxu0 0.0
    %135 = vmatpush2.msra.mxu0 0.0
    %136 = vmatprep.subr.mxu0 0.0
    %137 = vmatpush2.msra.mxu0 0.0
    %138 = vmatprep.subr.mxu0 0.0
    %139 = vmatpush2.msra.mxu0 0.0
    %140 = vmatprep.subr.mxu0 0.0
    %141 = vmatpush2.msra.mxu0 0.0
    %142 = vmatprep.subr.mxu0 0.0
    %143 = vmatpush2.msra.mxu0 0.0
    %144 = vmatprep.subr.mxu0 0.0
    %145 = vmatpush2.msra.mxu0 0.0
    %146 = vmatprep.subr.mxu0 0.0
    %147 = vmatpush2.msra.mxu0 0.0
    %148 = vmatprep.subr.mxu0 0.0
    %149 = vmatpush2.msra.mxu0 0.0
    %150 = vmatprep.subr.mxu0 0.0
    %151 = vmatpush2.msra.mxu0 0.0
    %152 = vmatprep.subr.mxu0 0.0
    %153 = vmatpush2.msra.mxu0 0.0
    %154 = vmatprep.subr.mxu0 0.0
    %155 = vmatpush2.msra.mxu0 0.0
    %156 = vmatprep.mubr.f32.mxu0 0.0
    %157 = vmatmul.mubr.f32.gmra.mxu0 %v90
    %v158 = vpop.f32.mrf.mxu0
    %v159 = vadd.f32 %v81, %v158
    %v160 = vpop.f32.mrf.mxu0
    %v161 = vadd.f32 %v85, %v160
    %162 = vdwg.mxu0
    %v163 = vadd.f32 %v159, %v161
    %vm164 = vcmask 860928
    %v165 = vsel %vm164, %v163, -inf
    %166 = vmax.xlane.f32.xlu0 %v165
    %v167 = vpop.xlane.xlu0 %166
    %v168 = vsub.f32 %v163, %v167
    %v169 = vmul.f32 %v168, 1.442695
    %v170 = vpow.pop %v169
    %172 = vrot.lane.b32.xlu0 %v170, 32
    %v173 = vpop.permute.xlu0 %172
    %vm175 = vcmask 73728
    %v176 = vsel %vm175, %v173, 0.0
    %177 = vadd.xlane.f32.xlu0 %v176
    %v178 = vpop.xlane.xlu0 %177
    %v179 = vrcp.pop %v178
    %v180 = vmul.f32 %v170, %v179
    %v181 = vld [vmem:[%s3] sm:$0xff]
    %v182 = vld [vmem:[%s3 + $0x8] sm:$0x3]
    %184 = vrot.lane.b32.xlu0 %v180, 32
    %v185 = vpop.permute.xlu0 %184
    %vm186 = vcmask 80896
    %v187 = vsel %vm186, %v185, 0
    %vm189 = vcmask 1041408
    %v191 = vsel %vm189, %v182, 0
    %193 = vmatprep.subr.mxu0 0.0
    %194 = vmatpush1.msra.mxu0 0.0
    %195 = vmatprep.subr.mxu0 0.0
    %196 = vmatpush1.msra.mxu0 0.0
    %197 = vmatprep.subr.mxu0 0.0
    %198 = vmatpush1.msra.mxu0 0.0
    %199 = vmatprep.subr.mxu0 0.0
    %200 = vmatpush1.msra.mxu0 0.0
    %201 = vmatprep.subr.mxu0 0.0
    %202 = vmatpush1.msra.mxu0 0.0
    %203 = vmatprep.subr.mxu0 0.0
    %204 = vmatpush1.msra.mxu0 0.0
    %205 = vmatprep.subr.mxu0 0.0
    %206 = vmatpush1.msra.mxu0 0.0
    %207 = vmatprep.subr.mxu0 0.0
    %208 = vmatpush1.msra.mxu0 0.0
    %209 = vmatprep.subr.mxu0 0.0
    %210 = vmatpush1.msra.mxu0 0.0
    %211 = vmatprep.subr.mxu0 0.0
    %212 = vmatpush1.msra.mxu0 0.0
    %213 = vmatprep.subr.mxu0 0.0
    %214 = vmatpush1.msra.mxu0 0.0
    %215 = vmatprep.subr.mxu0 0.0
    %216 = vmatpush1.msra.mxu0 0.0
    %217 = vmatprep.subr.mxu0 0.0
    %218 = vmatpush1.msra.mxu0 0.0
    %219 = vmatprep.subr.mxu0 0.0
    %220 = vmatpush1.msra.mxu0 0.0
    %221 = vmatprep.subr.mxu0 0.0
    %222 = vmatpush1.msra.mxu0 %v191
    %223 = vmatprep.subr.mxu0 0.0
    %224 = vmatpush1.msra.mxu0 %v181
    %225 = vmatprep.subr.mxu0 0.0
    %226 = vmatpush2.msra.mxu0 0.0
    %227 = vmatprep.subr.mxu0 0.0
    %228 = vmatpush2.msra.mxu0 0.0
    %229 = vmatprep.subr.mxu0 0.0
    %230 = vmatpush2.msra.mxu0 0.0
    %231 = vmatprep.subr.mxu0 0.0
    %232 = vmatpush2.msra.mxu0 0.0
    %233 = vmatprep.subr.mxu0 0.0
    %234 = vmatpush2.msra.mxu0 0.0
    %235 = vmatprep.subr.mxu0 0.0
    %236 = vmatpush2.msra.mxu0 0.0
    %237 = vmatprep.subr.mxu0 0.0
    %238 = vmatpush2.msra.mxu0 0.0
    %239 = vmatprep.subr.mxu0 0.0
    %240 = vmatpush2.msra.mxu0 0.0
    %241 = vmatprep.subr.mxu0 0.0
    %242 = vmatpush2.msra.mxu0 0.0
    %243 = vmatprep.subr.mxu0 0.0
    %244 = vmatpush2.msra.mxu0 0.0
    %245 = vmatprep.subr.mxu0 0.0
    %246 = vmatpush2.msra.mxu0 0.0
    %247 = vmatprep.subr.mxu0 0.0
    %248 = vmatpush2.msra.mxu0 0.0
    %249 = vmatprep.subr.mxu0 0.0
    %250 = vmatpush2.msra.mxu0 0.0
    %251 = vmatprep.subr.mxu0 0.0
    %252 = vmatpush2.msra.mxu0 0.0
    %253 = vmatprep.subr.mxu0 0.0
    %254 = vmatpush2.msra.mxu0 0.0
    %255 = vmatprep.subr.mxu0 0.0
    %256 = vmatpush2.msra.mxu0 0.0
    %257 = vmatprep.mubr.f32.mxu0 0.0
    %258 = vmatmul.mubr.f32.gmra.mxu0 %v187
    %v259 = vpop.f32.mrf.mxu0
    %v260 = vadd.f32 0.0, %v259
    %v261 = vpop.f32.mrf.mxu0
    %262 = vdwg.mxu0
    %v263 = vld [vmem:[#allocation5 + $0x80] sm:$0xff]
    %v264 = vld [vmem:[#allocation5 + $0x90] sm:$0xff]
    %v265 = vld [vmem:[#allocation5 + $0xa0] sm:$0xff]
    %v266 = vld [vmem:[#allocation5 + $0xb0] sm:$0xff]
    %v268 = vsel %vm57, %v260, 0
    %270 = vmatprep.subr.mxu0 0.0
    %271 = vmatpush1.msra.mxu0 0.0
    %272 = vmatprep.subr.mxu0 0.0
    %273 = vmatpush1.msra.mxu0 0.0
    %274 = vmatprep.subr.mxu0 0.0
    %275 = vmatpush1.msra.mxu0 0.0
    %276 = vmatprep.subr.mxu0 0.0
    %277 = vmatpush1.msra.mxu0 0.0
    %278 = vmatprep.subr.mxu0 0.0
    %279 = vmatpush1.msra.mxu0 0.0
    %280 = vmatprep.subr.mxu0 0.0
    %281 = vmatpush1.msra.mxu0 0.0
    %282 = vmatprep.subr.mxu0 0.0
    %283 = vmatpush1.msra.mxu0 0.0
    %284 = vmatprep.subr.mxu0 0.0
    %285 = vmatpush1.msra.mxu0 0.0
    %286 = vmatprep.subr.mxu0 0.0
    %287 = vmatpush1.msra.mxu0 0.0
    %288 = vmatprep.subr.mxu0 0.0
    %289 = vmatpush1.msra.mxu0 0.0
    %290 = vmatprep.subr.mxu0 0.0
    %291 = vmatpush1.msra.mxu0 0.0
    %292 = vmatprep.subr.mxu0 0.0
    %293 = vmatpush1.msra.mxu0 0.0
    %294 = vmatprep.subr.mxu0 0.0
    %295 = vmatpush1.msra.mxu0 %v266
    %296 = vmatprep.subr.mxu0 0.0
    %297 = vmatpush1.msra.mxu0 %v265
    %298 = vmatprep.subr.mxu0 0.0
    %299 = vmatpush1.msra.mxu0 %v264
    %300 = vmatprep.subr.mxu0 0.0
    %301 = vmatpush1.msra.mxu0 %v263
    %302 = vmatprep.subr.mxu0 0.0
    %303 = vmatpush2.msra.mxu0 0.0
    %304 = vmatprep.subr.mxu0 0.0
    %305 = vmatpush2.msra.mxu0 0.0
    %306 = vmatprep.subr.mxu0 0.0
    %307 = vmatpush2.msra.mxu0 0.0
    %308 = vmatprep.subr.mxu0 0.0
    %309 = vmatpush2.msra.mxu0 0.0
    %310 = vmatprep.subr.mxu0 0.0
    %311 = vmatpush2.msra.mxu0 0.0
    %312 = vmatprep.subr.mxu0 0.0
    %313 = vmatpush2.msra.mxu0 0.0
    %314 = vmatprep.subr.mxu0 0.0
    %315 = vmatpush2.msra.mxu0 0.0
    %316 = vmatprep.subr.mxu0 0.0
    %317 = vmatpush2.msra.mxu0 0.0
    %318 = vmatprep.subr.mxu0 0.0
    %319 = vmatpush2.msra.mxu0 0.0
    %320 = vmatprep.subr.mxu0 0.0
    %321 = vmatpush2.msra.mxu0 0.0
    %322 = vmatprep.subr.mxu0 0.0
    %323 = vmatpush2.msra.mxu0 0.0
    %324 = vmatprep.subr.mxu0 0.0
    %325 = vmatpush2.msra.mxu0 0.0
    %326 = vmatprep.subr.mxu0 0.0
    %327 = vmatpush2.msra.mxu0 0.0
    %328 = vmatprep.subr.mxu0 0.0
    %329 = vmatpush2.msra.mxu0 0.0
    %330 = vmatprep.subr.mxu0 0.0
    %331 = vmatpush2.msra.mxu0 0.0
    %332 = vmatprep.subr.mxu0 0.0
    %333 = vmatpush2.msra.mxu0 0.0
    %334 = vmatprep.mubr.f32.mxu0 0.0
    %335 = vmatmul.mubr.f32.gmra.mxu0 %v268
    %v336 = vpop.f32.mrf.mxu0
    %v337 = vadd.f32 0.0, %v336
    %v338 = vpop.f32.mrf.mxu0
    %339 = vdwg.mxu0
    %v340 = vadd.f32 %v159, %v337
    %v341 = vmax.f32 %v340, 0.0
    %v342 = vld [vmem:[#allocation5 + $0xc0] sm:$0xff]
    %v343 = vld [vmem:[#allocation5 + $0xd0] sm:$0xff]
    %v344 = vld [vmem:[#allocation5 + $0xe0] sm:$0xff]
    %v345 = vld [vmem:[#allocation5 + $0xf0] sm:$0xff]
    %v346 = vld [vmem:[#allocation5 + $0x141] ss:$0 sm:$0xff]
    %v348 = vsel %vm57, %v341, 0
    %350 = vmatprep.subr.mxu0 0.0
    %351 = vmatpush1.msra.mxu0 0.0
    %352 = vmatprep.subr.mxu0 0.0
    %353 = vmatpush1.msra.mxu0 0.0
    %354 = vmatprep.subr.mxu0 0.0
    %355 = vmatpush1.msra.mxu0 0.0
    %356 = vmatprep.subr.mxu0 0.0
    %357 = vmatpush1.msra.mxu0 0.0
    %358 = vmatprep.subr.mxu0 0.0
    %359 = vmatpush1.msra.mxu0 0.0
    %360 = vmatprep.subr.mxu0 0.0
    %361 = vmatpush1.msra.mxu0 0.0
    %362 = vmatprep.subr.mxu0 0.0
    %363 = vmatpush1.msra.mxu0 0.0
    %364 = vmatprep.subr.mxu0 0.0
    %365 = vmatpush1.msra.mxu0 0.0
    %366 = vmatprep.subr.mxu0 0.0
    %367 = vmatpush1.msra.mxu0 0.0
    %368 = vmatprep.subr.mxu0 0.0
    %369 = vmatpush1.msra.mxu0 0.0
    %370 = vmatprep.subr.mxu0 0.0
    %371 = vmatpush1.msra.mxu0 0.0
    %372 = vmatprep.subr.mxu0 0.0
    %373 = vmatpush1.msra.mxu0 0.0
    %374 = vmatprep.subr.mxu0 0.0
    %375 = vmatpush1.msra.mxu0 %v345
    %376 = vmatprep.subr.mxu0 0.0
    %377 = vmatpush1.msra.mxu0 %v344
    %378 = vmatprep.subr.mxu0 0.0
    %379 = vmatpush1.msra.mxu0 %v343
    %380 = vmatprep.subr.mxu0 0.0
    %381 = vmatpush1.msra.mxu0 %v342
    %382 = vmatprep.subr.mxu0 0.0
    %383 = vmatpush2.msra.mxu0 0.0
    %384 = vmatprep.subr.mxu0 0.0
    %385 = vmatpush2.msra.mxu0 0.0
    %386 = vmatprep.subr.mxu0 0.0
    %387 = vmatpush2.msra.mxu0 0.0
    %388 = vmatprep.subr.mxu0 0.0
    %389 = vmatpush2.msra.mxu0 0.0
    %390 = vmatprep.subr.mxu0 0.0
    %391 = vmatpush2.msra.mxu0 0.0
    %392 = vmatprep.subr.mxu0 0.0
    %393 = vmatpush2.msra.mxu0 0.0
    %394 = vmatprep.subr.mxu0 0.0
    %395 = vmatpush2.msra.mxu0 0.0
    %396 = vmatprep.subr.mxu0 0.0
    %397 = vmatpush2.msra.mxu0 0.0
    %398 = vmatprep.subr.mxu0 0.0
    %399 = vmatpush2.msra.mxu0 0.0
    %400 = vmatprep.subr.mxu0 0.0
    %401 = vmatpush2.msra.mxu0 0.0
    %402 = vmatprep.subr.mxu0 0.0
    %403 = vmatpush2.msra.mxu0 0.0
    %404 = vmatprep.subr.mxu0 0.0
    %405 = vmatpush2.msra.mxu0 0.0
    %406 = vmatprep.subr.mxu0 0.0
    %407 = vmatpush2.msra.mxu0 0.0
    %408 = vmatprep.subr.mxu0 0.0
    %409 = vmatpush2.msra.mxu0 0.0
    %410 = vmatprep.subr.mxu0 0.0
    %411 = vmatpush2.msra.mxu0 0.0
    %412 = vmatprep.subr.mxu0 0.0
    %413 = vmatpush2.msra.mxu0 0.0
    %414 = vmatprep.mubr.f32.mxu0 0.0
    %415 = vmatmul.mubr.f32.gmra.mxu0 %v348
    %v416 = vpop.f32.mrf.mxu0
    %v417 = vadd.f32 %v346, %v416
    %v418 = vpop.f32.mrf.mxu0
    %419 = vdwg.mxu0
    %v420 = vadd.f32 %v417, %v161
    %v421 = vxor.u32 %v420, 2147483648
    %v422 = vmul.f32 %v421, 1.442695
    %v423 = vpow.pop %v422
    %v424 = vadd.f32 %v423, 1.0
    %v425 = vrcp.pop %v424
    %v426 = vmul.f32 1.0, %v425
    %428 = vrot.lane.b32.xlu0 %v161, 64
    %v429 = vpop.permute.xlu0 %428
    %v431 = vmul.f32 %v426, %v429
    %433 = vrot.lane.b32.xlu0 %v431, 64
    %v434 = vpop.permute.xlu0 %433
    %v436 = vadd.f32 %v417, %v434
    %v437 = vtanh.pop %v436
    %v438 = vsub.f32 1.0, %v426
    %440 = vrot.lane.b32.xlu0 %v437, 96
    %v441 = vpop.permute.xlu0 %440
    %v443 = vmul.f32 %v438, %v441
    %v444 = vmul.f32 %v426, %v55
    %v445 = vadd.f32 %v443, %v444
    %447 = vrot.lane.b32.xlu0 %v445, 96
    %v448 = vpop.permute.xlu0 %447
    %vm450 = vcmask 253952
    %451 = vst.msk [vmem:[#allocation2] sm:$0x1] %vm450, %v448
    %v452 = vld [vmem:[#allocation5 + $0x100] sm:$0xff]
    %v453 = vld [vmem:[#allocation5 + $0x110] sm:$0xff]
    %v454 = vld [vmem:[#allocation5 + $0x120] sm:$0xff]
    %v455 = vld [vmem:[#allocation5 + $0x130] sm:$0xff]
    %v456 = vld [vmem:[#allocation5 + $0x142] ss:$0 sm:$0xff]
    %v457 = vsel %vm57, %v448, 0
    %459 = vmatprep.subr.mxu0 0.0
    %460 = vmatpush1.msra.mxu0 0.0
    %461 = vmatprep.subr.mxu0 0.0
    %462 = vmatpush1.msra.mxu0 0.0
    %463 = vmatprep.subr.mxu0 0.0
    %464 = vmatpush1.msra.mxu0 0.0
    %465 = vmatprep.subr.mxu0 0.0
    %466 = vmatpush1.msra.mxu0 0.0
    %467 = vmatprep.subr.mxu0 0.0
    %468 = vmatpush1.msra.mxu0 0.0
    %469 = vmatprep.subr.mxu0 0.0
    %470 = vmatpush1.msra.mxu0 0.0
    %471 = vmatprep.subr.mxu0 0.0
    %472 = vmatpush1.msra.mxu0 0.0
    %473 = vmatprep.subr.mxu0 0.0
    %474 = vmatpush1.msra.mxu0 0.0
    %475 = vmatprep.subr.mxu0 0.0
    %476 = vmatpush1.msra.mxu0 0.0
    %477 = vmatprep.subr.mxu0 0.0
    %478 = vmatpush1.msra.mxu0 0.0
    %479 = vmatprep.subr.mxu0 0.0
    %480 = vmatpush1.msra.mxu0 0.0
    %481 = vmatprep.subr.mxu0 0.0
    %482 = vmatpush1.msra.mxu0 0.0
    %483 = vmatprep.subr.mxu0 0.0
    %484 = vmatpush1.msra.mxu0 %v455
    %485 = vmatprep.subr.mxu0 0.0
    %486 = vmatpush1.msra.mxu0 %v454
    %487 = vmatprep.subr.mxu0 0.0
    %488 = vmatpush1.msra.mxu0 %v453
    %489 = vmatprep.subr.mxu0 0.0
    %490 = vmatpush1.msra.mxu0 %v452
    %491 = vmatprep.subr.mxu0 0.0
    %492 = vmatpush2.msra.mxu0 0.0
    %493 = vmatprep.subr.mxu0 0.0
    %494 = vmatpush2.msra.mxu0 0.0
    %495 = vmatprep.subr.mxu0 0.0
    %496 = vmatpush2.msra.mxu0 0.0
    %497 = vmatprep.subr.mxu0 0.0
    %498 = vmatpush2.msra.mxu0 0.0
    %499 = vmatprep.subr.mxu0 0.0
    %500 = vmatpush2.msra.mxu0 0.0
    %501 = vmatprep.subr.mxu0 0.0
    %502 = vmatpush2.msra.mxu0 0.0
    %503 = vmatprep.subr.mxu0 0.0
    %504 = vmatpush2.msra.mxu0 0.0
    %505 = vmatprep.subr.mxu0 0.0
    %506 = vmatpush2.msra.mxu0 0.0
    %507 = vmatprep.subr.mxu0 0.0
    %508 = vmatpush2.msra.mxu0 0.0
    %509 = vmatprep.subr.mxu0 0.0
    %510 = vmatpush2.msra.mxu0 0.0
    %511 = vmatprep.subr.mxu0 0.0
    %512 = vmatpush2.msra.mxu0 0.0
    %513 = vmatprep.subr.mxu0 0.0
    %514 = vmatpush2.msra.mxu0 0.0
    %515 = vmatprep.subr.mxu0 0.0
    %516 = vmatpush2.msra.mxu0 0.0
    %517 = vmatprep.subr.mxu0 0.0
    %518 = vmatpush2.msra.mxu0 0.0
    %519 = vmatprep.subr.mxu0 0.0
    %520 = vmatpush2.msra.mxu0 0.0
    %521 = vmatprep.subr.mxu0 0.0
    %522 = vmatpush2.msra.mxu0 0.0
    %523 = vmatprep.mubr.f32.mxu0 0.0
    %524 = vmatmul.mubr.f32.gmra.mxu0 %v457
    %v525 = vpop.f32.mrf.mxu0
    %v526 = vadd.f32 %v456, %v525
    %v527 = vpop.f32.mrf.mxu0
    %528 = vdwg.mxu0
    %vm529 = vcmask 516096
    %v530 = vsel %vm529, %v526, -inf
    %531 = vmax.xlane.f32.xlu0 %v530
    %v532 = vpop.xlane.xlu0 %531
    %v533 = vsub.f32 %v526, %v532
    %v534 = vmul.f32 %v533, 1.442695
    %v535 = vpow.pop %v534
    %v536 = vsel %vm529, %v535, 0.0
    %537 = vadd.xlane.f32.xlu0 %v536
    %v538 = vpop.xlane.xlu0 %537
    %v539 = vlog2.pop %v538
    %v540 = vmul.f32 %v539, 0.6931472
    %v541 = vsub.f32 %v533, %v540
    %542 = vrot.lane.b32.xlu0 %v445, 32
    %v543 = vpop.permute.xlu0 %542
    %v545 = vsel %vm88, %v541, %v543
    %vm546 = vcmask 785408
    %v547 = vsel %vm546, %v545, %v180
    %vm548 = vcmask 867328
    %v549 = vsel %vm548, %v547, 0.0
    %550 = vst [vmem:[#allocation8] sm:$0x1] %v549
    // Predicated region
    $region26: #{tpu_custom_call.1} parent=1 // pred_check
      _
    $region27: #{tpu_custom_call.1} parent=1 // pred_check_branch
      %552 = sbr.rel (0) target = $region29
    $region28: #{tpu_custom_call.1} parent=1 // pred_region
      %s554 = ssub.s32 16, 16
      %555 = vsyncadd [#allocation7], %s554
      %s557 = sshll.u32 [#allocation8], 4
      %s558 = int_to_ptr.vmem [resolvable:$true] %s557
      %560 = dma.vmem_to_hbm [thread:$0]  %s558, 16, %s5, [#allocation7]
    $region29: #{tpu_custom_call.1} parent=1 // pred_fallthru
      _
    // Predicated region
    $region30: #{tpu_custom_call.1} parent=1 // pred_check
      _
    $region31: #{tpu_custom_call.1} parent=1 // pred_check_branch
      %562 = sbr.rel (0) target = $region33
    $region32: #{tpu_custom_call.1} parent=1 // pred_region
      %563 = dma.done [#allocation7], 16
    $region33: #{tpu_custom_call.1} parent=1 // pred_fallthru
      _
    %564 = vsyncpa [#allocation6], 1
    %565 = vsyncpa [#allocation7], 1

</llo_original>
